<compile_context>
chip_gen: v6e
topology: v6e:2x2x1
jax: 0.10.0
libtpu: 0.0.40
codegen_flags: <defaults>
</compile_context>

<pallas_src>
import numpy as np
import jax
import jax.numpy as jnp
from jax import lax
from jax.experimental import pallas as pl
from jax.experimental.pallas import tpu as pltpu

# Flip to jnp.bfloat16 on v6e/v7x to hit the 256x256 MXU rate (accumulation stays f32).
MATMUL_DTYPE = jnp.float32

# ----------------------------------------------------------------------------
# Irreps bookkeeping (glue)
# ----------------------------------------------------------------------------
def parse_irreps(s):
    irr = []
    for tok in s.replace(" ", "").split("+"):
        mul, ir = tok.split("x")
        l = int(ir[:-1])
        p = 1 if ir[-1] == "e" else -1
        irr.append((int(mul), l, p))
    return irr


def irreps_dim(irr):
    return sum(m * (2 * l + 1) for m, l, _ in irr)


def irreps_offsets(irr):
    offs, o = [], 0
    for m, l, _ in irr:
        offs.append(o)
        o += m * (2 * l + 1)
    return offs


IRR_IN = parse_irreps("2x0e")
IRR_SH = parse_irreps("1x0e+1x1o+1x2e")                       # spherical harmonics, lmax=2
IRR_MID1 = parse_irreps("8x0e+8x1o+8x2e")
IRR_MID2 = parse_irreps("8x0e+8x0o+8x1e+8x1o+8x2e+8x2o")

_HH_lists = [["4x0e", "2x1o"], ["2x1o", "1x0e+1x1e+1x2e"]]
_CC_lists = [["9x0e", "6x1o", "3x2e"],
             ["6x1o", ("1x0e+1x1e+1x2e+" * 4)[:-1], ("1x1o+1x2o+1x3o+" * 2)[:-1]],
             ["3x2e", ("1x1o+1x2o+1x3o+" * 2)[:-1], "1x0e+1x1e+1x2e+1x3e+1x4e"]]
_CH_lists = [["6x0e", "3x1o"],
             ["4x1o", ("1x0e+1x1e+1x2e+" * 2)[:-1]],
             ["2x2e", "1x1o+1x2o+1x3o"]]


def _join(lists):
    return "+".join(f1 for f in lists for f1 in f)


IRR_HH = parse_irreps(_join(_HH_lists))      # dim 25
IRR_CC = parse_irreps(_join(_CC_lists))      # dim 196
IRR_CH = parse_irreps(_join(_CH_lists))      # dim 70
IRR_SCREEN_MID = parse_irreps("32x0e+1x2e")
IRR_SCREEN_OUT = parse_irreps("1x0e+1x2e")
IRR_GAP_MID = parse_irreps("32x0e")
IRR_GAP_OUT = parse_irreps("3x0e")

# ----------------------------------------------------------------------------
# Real Wigner-3j coefficients (numerical, glue-only; cached)
# ----------------------------------------------------------------------------
def _c2r(l):
    d = 2 * l + 1
    U = np.zeros((d, d), dtype=np.complex128)
    for m in range(-l, l + 1):
        i = m + l
        if m > 0:
            U[i, -m + l] = 1 / np.sqrt(2)
            U[i, m + l] = (-1) ** m / np.sqrt(2)
        elif m == 0:
            U[i, l] = 1.0
        else:
            U[i, m + l] = 1j / np.sqrt(2)
            U[i, -m + l] = -1j * (-1) ** m / np.sqrt(2)
    return U


def _real_generators(l):
    d = 2 * l + 1
    if l == 0:
        return [np.zeros((1, 1)) for _ in range(3)]
    m = np.arange(-l, l + 1)
    Jz = np.diag(m).astype(np.complex128)
    c = np.sqrt(l * (l + 1) - m[:-1] * (m[:-1] + 1))
    Jp = np.zeros((d, d), dtype=np.complex128)
    Jp[np.arange(1, d), np.arange(0, d - 1)] = c
    Jm = Jp.conj().T
    Jx = (Jp + Jm) / 2
    Jy = (Jp - Jm) / 2j
    U = _c2r(l)
    return [np.real(U @ (-1j * J) @ U.conj().T) for J in (Jx, Jy, Jz)]


_W3J_CACHE = {}


def wigner_3j(l1, l2, l3):
    key = (l1, l2, l3)
    if key in _W3J_CACHE:
        return _W3J_CACHE[key]
    G1, G2, G3 = _real_generators(l1), _real_generators(l2), _real_generators(l3)
    d1, d2, d3 = 2 * l1 + 1, 2 * l2 + 1, 2 * l3 + 1
    I1, I2, I3 = np.eye(d1), np.eye(d2), np.eye(d3)
    rows = []
    for a in range(3):
        rows.append(np.kron(np.kron(G1[a], I2), I3)
                    + np.kron(np.kron(I1, G2[a]), I3)
                    + np.kron(np.kron(I1, I2), G3[a]))
    M = np.concatenate(rows, axis=0)
    _, _, vh = np.linalg.svd(M)
    v = vh[-1]
    k = int(np.argmax(np.abs(v)))
    v = np.sign(v[k]) * v
    v = v / np.linalg.norm(v)
    C = v.reshape(d1, d2, d3).astype(np.float32)
    _W3J_CACHE[key] = C
    return C

# ----------------------------------------------------------------------------
# Activation constants (e3nn normalize2mom, analytic quadrature)
# ----------------------------------------------------------------------------
_z = np.linspace(-8.0, 8.0, 160001)
_pdf = np.exp(-0.5 * _z ** 2) / np.sqrt(2 * np.pi)
C_TANH = float(1.0 / np.sqrt(np.sum(_pdf * np.tanh(_z) ** 2) * (_z[1] - _z[0])))
C_RELU = float(np.sqrt(2.0))


def scalar_prefix_len(irr, acts):
    """Number of leading channels carrying an activation.

    Every nn.Activation in this model activates only scalar irreps and those
    are always listed first, so the mask is a prefix of ones — this lets the
    Pallas kernel rebuild the mask from an iota instead of capturing an array.
    """
    mask = []
    for (mul, l, _), a in zip(irr, acts):
        mask += [1.0 if a else 0.0] * (mul * (2 * l + 1))
    mask = np.asarray(mask, np.float32)
    n = int(mask.sum())
    assert np.all(mask[:n] == 1.0) and np.all(mask[n:] == 0.0), "mask is not a prefix"
    return n


THR_IN = scalar_prefix_len(IRR_IN, [True])                                   # 2
THR_MID1 = scalar_prefix_len(IRR_MID1, [True, None, None])                   # 8
THR_MID2 = scalar_prefix_len(IRR_MID2, [True, True, None, None, None, None]) # 16
THR_SCREEN = scalar_prefix_len(IRR_SCREEN_MID, [True, None])                 # 32
THR_GAP = scalar_prefix_len(IRR_GAP_MID, [True])                             # 32

# ----------------------------------------------------------------------------
# Pallas kernels
# ----------------------------------------------------------------------------
def _apply_act(h, act):
    """act: None | 'relu' | ('tanh', prefix_len).

    All constants here are Python scalars baked at trace time — no array
    constants are captured by the kernel (the activation mask is rebuilt with
    broadcasted_iota against a static threshold).
    """
    if act is None:
        return h
    if act == "relu":      # normalize2mom constant folded into the next weight
        return jnp.maximum(h, 0.0)
    _, thresh = act        # masked e3nn tanh on leading scalar channels only
    tanh_h = np.float32(C_TANH) * jnp.tanh(h)
    if thresh >= h.shape[1]:
        return tanh_h
    col = lax.broadcasted_iota(jnp.int32, h.shape, dimension=1)
    return jnp.where(col < thresh, tanh_h, h)


def _fused_chain_kernel_factory(pre_acts, post_act, n_layers):
    def kernel(*refs):
        x_ref = refs[0]
        w_refs = refs[1:1 + n_layers]
        o_ref = refs[1 + n_layers]
        h = x_ref[...]
        for w_ref, act in zip(w_refs, pre_acts):
            h = _apply_act(h, act)
            h = jnp.dot(h.astype(MATMUL_DTYPE), w_ref[...].astype(MATMUL_DTYPE),
                        preferred_element_type=jnp.float32)
        o_ref[...] = _apply_act(h, post_act)
    return kernel


def fused_dense_chain(x, weights, pre_acts=None, post_act=None, m_tile=128):
    """y = post_act( ... act_1(act_0(x) @ W0) @ W1 ... ) — whole chain in one Pallas kernel.

    All layer weights stay resident in VMEM; intermediate activations never touch HBM.
    Rows are tiled (grid, 'parallel') when M is large so block footprints stay small
    on v7x's 64 MiB VMEM.
    """
    x = jnp.asarray(x, jnp.float32)
    weights = [jnp.asarray(w, jnp.float32) for w in weights]
    n = len(weights)
    pre_acts = list(pre_acts) if pre_acts is not None else [None] * n
    assert len(pre_acts) == n

    # pad the first contraction dim to a multiple of 8 (layout friendliness);
    # prefix-threshold activations are unaffected (padded cols sit past the prefix).
    K0 = x.shape[1]
    kpad = (-K0) % 8
    if kpad:
        x = jnp.pad(x, ((0, 0), (0, kpad)))
        weights[0] = jnp.pad(weights[0], ((0, kpad), (0, 0)))

    M = x.shape[0]
    N = weights[-1].shape[1]
    kernel = _fused_chain_kernel_factory(tuple(pre_acts), post_act, n)

    if M > m_tile:
        Mp = ((M + m_tile - 1) // m_tile) * m_tile
        xp = jnp.pad(x, ((0, Mp - M), (0, 0)))
        in_specs = [pl.BlockSpec((m_tile, x.shape[1]), lambda i: (i, 0))]
        for w in weights:
            in_specs.append(pl.BlockSpec(w.shape, lambda i: (0, 0)))   # resident weights
        out = pl.pallas_call(
            kernel,
            out_shape=jax.ShapeDtypeStruct((Mp, N), jnp.float32),
            grid=(Mp // m_tile,),
            in_specs=in_specs,
            out_specs=pl.BlockSpec((m_tile, N), lambda i: (i, 0)),
            compiler_params=pltpu.CompilerParams(dimension_semantics=("parallel",)),
        )(xp, *weights)
        return out[:M]

    return pl.pallas_call(
        kernel,
        out_shape=jax.ShapeDtypeStruct((M, N), jnp.float32),
    )(x, *weights)


def _uvw_chunk_kernel(w_ref, t_ref, o_ref):
    # o[b, w, k] = sum_a W[b, w, a] * T[b, k, a]  for a chunk of (edge, path) pairs
    o_ref[...] = jnp.einsum(
        "bwa,bka->bwk",
        w_ref[...].astype(MATMUL_DTYPE), t_ref[...].astype(MATMUL_DTYPE),
        preferred_element_type=jnp.float32)


def pallas_uvw(Wb, Tb, gb=64):
    """Batched small matmuls Wb (B, Wm, A) x Tb (B, K, A) -> (B, Wm, K).

    The (edge, path) batch axis is chunked into blocks of `gb` so the grid has
    ~B/gb steps instead of B, removing >90% of the per-step pipeline overhead.
    """
    B, Wm, A = Wb.shape
    K = Tb.shape[1]
    Bp = ((B + gb - 1) // gb) * gb
    if Bp != B:
        Wb = jnp.pad(Wb, ((0, Bp - B), (0, 0), (0, 0)))
        Tb = jnp.pad(Tb, ((0, Bp - B), (0, 0), (0, 0)))
    out = pl.pallas_call(
        _uvw_chunk_kernel,
        out_shape=jax.ShapeDtypeStruct((Bp, Wm, K), jnp.float32),
        grid=(Bp // gb,),
        in_specs=[pl.BlockSpec((gb, Wm, A), lambda b: (b, 0, 0)),
                  pl.BlockSpec((gb, K, A), lambda b: (b, 0, 0))],
        out_specs=pl.BlockSpec((gb, Wm, K), lambda b: (b, 0, 0)),
        compiler_params=pltpu.CompilerParams(dimension_semantics=("parallel",)),
    )(Wb, Tb)
    return out[:B]

# ----------------------------------------------------------------------------
# e3nn building blocks mapped onto the kernels above
# ----------------------------------------------------------------------------
RNG = np.random.default_rng(0)


def linear_matrix(irr_in, irr_out):
    """o3.Linear as a dense (d_in, d_out) matrix (block kron(W, I_{2l+1}) per matching irrep)."""
    din, dout = irreps_dim(irr_in), irreps_dim(irr_out)
    offi, offo = irreps_offsets(irr_in), irreps_offsets(irr_out)
    M = np.zeros((din, dout), np.float32)
    for j, (m3, l3, p3) in enumerate(irr_out):
        fan = sum(m1 for (m1, l1, p1) in irr_in if (l1, p1) == (l3, p3))
        if fan == 0:
            continue  # unmatched output irreps stay zero (as in o3.Linear)
        for i, (m1, l1, p1) in enumerate(irr_in):
            if (l1, p1) != (l3, p3):
                continue
            Wb = RNG.standard_normal((m1, m3)) / np.sqrt(fan)
            M[offi[i]:offi[i] + m1 * (2 * l1 + 1),
              offo[j]:offo[j] + m3 * (2 * l3 + 1)] += np.kron(Wb, np.eye(2 * l3 + 1))
    return M


def mlp_weights(dims):
    # e3nn FullyConnectedNet: 1/sqrt(fan_in) folded into the weights; the
    # normalize2mom(relu) constant of each hidden layer is folded into the NEXT
    # layer's weight so the kernel epilogue is a plain relu (mathematically identical).
    ws = [RNG.standard_normal((dims[i], dims[i + 1])).astype(np.float32) / np.sqrt(dims[i])
          for i in range(len(dims) - 1)]
    for i in range(1, len(ws)):
        ws[i] = ws[i] * np.float32(C_RELU)
    return ws


RELU_CHAIN = [None, "relu", "relu", "relu"]     # pre-activations for the 4-layer MLPs


def make_fctp(irr1, irr2, irr_out):
    """FullyConnectedTensorProduct ('uvw' paths) descriptor."""
    off1, off2, off3 = irreps_offsets(irr1), irreps_offsets(irr2), irreps_offsets(irr_out)
    fan = [0] * len(irr_out)
    for (m1, l1, p1) in irr1:
        for (m2, l2, p2) in irr2:
            for io, (m3, l3, p3) in enumerate(irr_out):
                if p1 * p2 == p3 and abs(l1 - l2) <= l3 <= l1 + l2:
                    fan[io] += m1 * m2
    paths, woff = [], 0
    for i1, (m1, l1, p1) in enumerate(irr1):
        for i2, (m2, l2, p2) in enumerate(irr2):
            for io, (m3, l3, p3) in enumerate(irr_out):
                if p1 * p2 == p3 and abs(l1 - l2) <= l3 <= l1 + l2:
                    paths.append(dict(o1=off1[i1], m1=m1, l1=l1,
                                      o2=off2[i2], m2=m2, l2=l2,
                                      o3=off3[io], m3=m3, l3=l3,
                                      woff=woff, wnum=m1 * m2 * m3,
                                      alpha=1.0 / np.sqrt(fan[io]),
                                      C=wigner_3j(l1, l2, l3)))
                    woff += m1 * m2 * m3
    return dict(paths=paths, weight_numel=woff, dim_out=irreps_dim(irr_out),
                A=max(p["m1"] * p["m2"] for p in paths),
                W=max(p["m3"] for p in paths))


TP1 = make_fctp(IRR_IN, IRR_SH, IRR_MID1)        # weight_numel = 48
TP2 = make_fctp(IRR_MID1, IRR_SH, IRR_MID2)      # weight_numel = 960
TPB = make_fctp(IRR_MID2, IRR_MID2, IRR_MID2)    # weight_numel = 30720


def fctp_forward(tp, x1, x2, w):
    """FCTP forward: tiny CG contraction in glue, chunked per-edge weight mixing in Pallas."""
    # TODO(synk): the CG contraction could also be moved inside the Pallas kernel
    #             (CG tensors are static constants); kept in XLA glue for clarity.
    E = x1.shape[0]
    A = max(8, ((tp["A"] + 7) // 8) * 8)   # padded (u*v) contraction axis
    Wm = tp["W"]
    K = 8                                   # padded 2*l3+1 (<=5)
    W_list, T_list = [], []
    for p in tp["paths"]:
        d1, d2, d3 = 2 * p["l1"] + 1, 2 * p["l2"] + 1, 2 * p["l3"] + 1
        mm = p["m1"] * p["m2"]
        x1p = x1[:, p["o1"]:p["o1"] + p["m1"] * d1].reshape(E, p["m1"], d1)
        x2p = x2[:, p["o2"]:p["o2"] + p["m2"] * d2].reshape(E, p["m2"], d2)
        # Clebsch-Gordan contraction (structural glue, tiny dims)
        T = jnp.einsum("eui,evj,ijk->euvk", x1p, x2p, p["C"]).reshape(E, mm, d3)
        Wp = w[:, p["woff"]:p["woff"] + p["wnum"]].reshape(E, mm, p["m3"])
        # move the (u*v) contraction axis last -> lane axis inside the kernel
        T = jnp.pad(jnp.transpose(T, (0, 2, 1)), ((0, 0), (0, K - d3), (0, A - mm)))
        Wp = jnp.pad(jnp.transpose(Wp, (0, 2, 1)), ((0, 0), (0, Wm - p["m3"]), (0, A - mm)))
        T_list.append(T)
        W_list.append(Wp)
    P = len(tp["paths"])
    Tb = jnp.stack(T_list, axis=1).reshape(E * P, K, A)
    Wb = jnp.stack(W_list, axis=1).reshape(E * P, Wm, A)
    Ob = pallas_uvw(Wb, Tb).reshape(E, P, Wm, K)
    out = jnp.zeros((E, tp["dim_out"]), jnp.float32)
    for pi, p in enumerate(tp["paths"]):
        d3 = 2 * p["l3"] + 1
        contrib = Ob[:, pi, :p["m3"], :d3].reshape(E, p["m3"] * d3) * np.float32(p["alpha"])
        out = out.at[:, p["o3"]:p["o3"] + p["m3"] * d3].add(contrib)
    return out

# ----------------------------------------------------------------------------
# Parameters + forward pass of V_theta
# ----------------------------------------------------------------------------
def build_params(emb_neurons=16, scaling=0.2):
    p = {}
    p["linear1"] = linear_matrix(IRR_IN, IRR_IN)
    p["linear2"] = linear_matrix(IRR_MID1, IRR_MID1)
    p["linear3"] = linear_matrix(IRR_MID2, IRR_MID2)
    # `scaling` is folded into the head weights at build time (no epilogue multiply)
    p["linearCC"] = linear_matrix(IRR_MID2, IRR_CC) * np.float32(scaling)
    p["linearHH"] = linear_matrix(IRR_MID2, IRR_HH) * np.float32(scaling)
    p["linearCH"] = linear_matrix(IRR_MID2, IRR_CH) * np.float32(scaling)
    p["linearC"] = linear_matrix(IRR_MID2, IRR_CC) * np.float32(scaling)
    p["linearH"] = linear_matrix(IRR_MID2, IRR_HH) * np.float32(scaling)
    # node heads C/H merged into one lane-denser matmul
    p["node_heads"] = np.concatenate([p["linearC"], p["linearH"]], axis=1)
    p["screen1"] = linear_matrix(IRR_MID2, IRR_SCREEN_MID)
    p["screen2"] = linear_matrix(IRR_SCREEN_MID, IRR_SCREEN_OUT)
    p["gap1"] = linear_matrix(IRR_MID2, IRR_GAP_MID)
    p["gap2"] = linear_matrix(IRR_GAP_MID, IRR_GAP_OUT)
    p["fc1"] = mlp_weights([1, emb_neurons, emb_neurons, emb_neurons, TP1["weight_numel"]])
    p["fc2"] = mlp_weights([1, emb_neurons, emb_neurons, emb_neurons, TP2["weight_numel"]])
    p["fc_bond"] = mlp_weights([1, emb_neurons, emb_neurons, emb_neurons, TPB["weight_numel"]])
    return p


def v_theta_forward(params, minibatch):
    sh = jnp.asarray(minibatch["sh"], jnp.float32)
    emb = jnp.asarray(minibatch["emb"], jnp.float32)
    f_in = jnp.asarray(minibatch["f_in"], jnp.float32)
    edge_src = minibatch["edge_src"]
    edge_dst = minibatch["edge_dst"]
    num_nodes = minibatch["num_nodes"]
    num_neighbors = minibatch["num_neighbors"]
    HH_ind = minibatch["HH_ind"]
    CC_ind = minibatch["CC_ind"]
    CH_ind = minibatch["CH_ind"]

    inv_sqrt_nn = np.float32(1.0 / np.sqrt(num_neighbors))

    def scatter_nodes(ef):
        # sum-scatter edge->dst node / sqrt(num_neighbors); linear in E (glue).
        # TODO(synk): at very large E this could become a PrefetchScalarGridSpec
        #             gather/accumulate Pallas kernel keyed on edge_dst.
        return jax.ops.segment_sum(ef, edge_dst, num_segments=num_nodes) * inv_sqrt_nn

    # linear1 + tanh(0e) activation fused into one kernel
    nf = fused_dense_chain(f_in, [params["linear1"]], post_act=("tanh", THR_IN))

    # edge embedding MLP fc1 (4 dots, 1 kernel), tensor product 1, scatter, linear2+act2
    w1 = fused_dense_chain(emb, params["fc1"], pre_acts=RELU_CHAIN)
    ef = fctp_forward(TP1, nf[edge_src], sh, w1)
    nf = fused_dense_chain(scatter_nodes(ef), [params["linear2"]],
                           post_act=("tanh", THR_MID1))

    # fc2, tensor product 2, scatter, linear3+act3
    w2 = fused_dense_chain(emb, params["fc2"], pre_acts=RELU_CHAIN)
    ef = fctp_forward(TP2, nf[edge_src], sh, w2)
    nf = fused_dense_chain(scatter_nodes(ef), [params["linear3"]],
                           post_act=("tanh", THR_MID2))

    # bond features: HH / CC / CH share fc_bond and the bond tensor product,
    # so run them once over the concatenated edge list and split afterwards.
    nHH, nCC, nCH = int(HH_ind.shape[0]), int(CC_ind.shape[0]), int(CH_ind.shape[0])
    bond_ind = jnp.concatenate([HH_ind, CC_ind, CH_ind])
    wb = fused_dense_chain(emb[bond_ind], params["fc_bond"], pre_acts=RELU_CHAIN)
    bond_f = fctp_forward(TPB, nf[edge_src[bond_ind]], nf[edge_dst[bond_ind]], wb)
    HH_f = bond_f[:nHH]
    CC_f = bond_f[nHH:nHH + nCC]
    CH_f = bond_f[nHH + nCC:]

    # bond heads: activation3 fused as a prologue; scaling already folded into weights
    edge_HH = fused_dense_chain(HH_f, [params["linearHH"]],
                                pre_acts=[("tanh", THR_MID2)])
    edge_CC = fused_dense_chain(CC_f, [params["linearCC"]],
                                pre_acts=[("tanh", THR_MID2)])
    edge_CH = fused_dense_chain(CH_f, [params["linearCH"]],
                                pre_acts=[("tanh", THR_MID2)])

    # node heads C + H merged into a single matmul (scaling folded in), split in glue
    d_cc = irreps_dim(IRR_CC)
    node_CH = fused_dense_chain(nf, [params["node_heads"]])
    node_C = node_CH[:, :d_cc]
    node_H = node_CH[:, d_cc:]

    # screen: linear -> masked tanh -> linear, single fused kernel
    screen_mat = fused_dense_chain(nf, [params["screen1"], params["screen2"]],
                                   pre_acts=[None, ("tanh", THR_SCREEN)])

    # gap head: identical weights for the three bond types -> batch rows, one kernel
    gap_in = jnp.concatenate([CC_f, HH_f, CH_f], axis=0)
    gap_all = fused_dense_chain(gap_in, [params["gap1"], params["gap2"]],
                                pre_acts=[None, ("tanh", THR_GAP)])
    gap_mat = [gap_all[:nCC], gap_all[nCC:nCC + nHH], gap_all[nCC + nHH:]]

    return {"H": node_H, "C": node_C, "HH": edge_HH, "CH": edge_CH, "CC": edge_CC,
            "screen": screen_mat, "gap": gap_mat}


# ----------------------------------------------------------------------------
if __name__ == "__main__":
    key = jax.random.PRNGKey(0)
    k1, k2, k3 = jax.random.split(key, 3)

    num_nodes = 6          # nodes 0,1 = "C"; 2..5 = "H"
    edge_src = jnp.array([0, 1, 2, 3, 4, 5, 0, 2, 0, 3, 1, 4, 1, 5], dtype=jnp.int32)
    edge_dst = jnp.array([1, 0, 3, 2, 5, 4, 2, 0, 3, 0, 4, 1, 5, 1], dtype=jnp.int32)
    E = int(edge_src.shape[0])
    CC_ind = jnp.array([0, 1], dtype=jnp.int32)
    HH_ind = jnp.array([2, 3, 4, 5], dtype=jnp.int32)
    CH_ind = jnp.array([6, 7, 8, 9, 10, 11, 12, 13], dtype=jnp.int32)

    sh = jax.random.normal(k1, (E, 9), jnp.float32)       # spherical harmonics, lmax=2
    emb = jax.random.normal(k2, (E, 1), jnp.float32)      # edge-length embedding
    f_in = jax.random.normal(k3, (num_nodes, 2), jnp.float32)

    minibatch = dict(sh=sh, emb=emb, f_in=f_in, edge_src=edge_src, edge_dst=edge_dst,
                     num_nodes=num_nodes, num_neighbors=3.0,
                     HH_ind=HH_ind, CC_ind=CC_ind, CH_ind=CH_ind)

    params = build_params(emb_neurons=16, scaling=0.2)
    out = v_theta_forward(params, minibatch)
    jax.tree_util.tree_map(lambda a: a.block_until_ready(), out)

    assert out["H"].shape == (num_nodes, irreps_dim(IRR_HH))      # (6, 25)
    assert out["C"].shape == (num_nodes, irreps_dim(IRR_CC))      # (6, 196)
    assert out["HH"].shape == (4, irreps_dim(IRR_HH))             # (4, 25)
    assert out["CC"].shape == (2, irreps_dim(IRR_CC))             # (2, 196)
    assert out["CH"].shape == (8, irreps_dim(IRR_CH))             # (8, 70)
    assert out["screen"].shape == (num_nodes, irreps_dim(IRR_SCREEN_OUT))  # (6, 6)
    assert [g.shape for g in out["gap"]] == [(2, 3), (4, 3), (8, 3)]

    # sanity: activations & tensor products produced finite values
    assert bool(jnp.all(jnp.isfinite(out["C"]))) and bool(jnp.all(jnp.isfinite(out["screen"])))

    print("KERNEL_OK")
</pallas_src>

<mosaic_0001>
module attributes {stable_mosaic.version = 11 : i64} {
  func.func @kernel(%arg0: memref<6x8xf32, #tpu.memory_space<vmem>>, %arg1: memref<8x2xf32, #tpu.memory_space<vmem>>, %arg2: memref<6x2xf32, #tpu.memory_space<vmem>>) attributes {dimension_semantics = [], scalar_prefetch = 0 : i64, scratch_operands = 0 : i64, tpu.core_type = #tpu.core_type<tc>} {
    %c0 = arith.constant 0 : index
    %c0_0 = arith.constant 0 : index
    %0 = vector.load %arg0[%c0, %c0_0] : memref<6x8xf32, #tpu.memory_space<vmem>>, vector<6x8xf32>
    %c0_1 = arith.constant 0 : index
    %c0_2 = arith.constant 0 : index
    %1 = vector.load %arg1[%c0_1, %c0_2] : memref<8x2xf32, #tpu.memory_space<vmem>>, vector<8x2xf32>
    %cst = arith.constant dense<0.000000e+00> : vector<6x2xf32>
    %2 = tpu.matmul %0, %1, %cst {dimension_numbers = #tpu.dot_dimension_numbers<[1], [0], [0], [1], [0, 0, 1, 1], [], []>} : vector<6x8xf32>, vector<8x2xf32>, vector<6x2xf32> -> vector<6x2xf32>
    %3 = math.tanh %2 : vector<6x2xf32>
    %cst_3 = arith.constant 1.5925374 : f32
    %4 = vector.broadcast %cst_3 : f32 to vector<6x2xf32>
    %5 = arith.mulf %4, %3 : vector<6x2xf32>
    %c0_4 = arith.constant 0 : index
    %c0_5 = arith.constant 0 : index
    %6 = vector.load %arg2[%c0_4, %c0_5] : memref<6x2xf32, #tpu.memory_space<vmem>>, vector<6x2xf32>
    tpu.vector_store %arg2[%c0_4, %c0_5], %5 {strides = array<i32>} : memref<6x2xf32, #tpu.memory_space<vmem>>, vector<6x2xf32>,
    return
  }
}

</mosaic_0001>

<llo_original>
// kernel: tpu_custom_call.1
$region0: #{tpu_custom_call.1}
  #allocation0 [shape = 'u32[]', space=smem, size = 0x4, offset = 0x4, fixed_abs, tag = 'smem constant byte address 0x4 - core index']
  #allocation1 [shape = 'u32[144,128]{1,0:T(1,128)}', space=vmem, size = 0x12000, scoped, tag = 'internal scratch']
  %s0 = inlined_call_operand.vmem [shape: f32[6,8], index: 0, kind: input, shape index: {}]
  %s1 = inlined_call_operand.vmem [shape: f32[8,2], index: 1, kind: input, shape index: {}]
  %s2 = inlined_call_operand.vmem [shape: f32[6,2], index: 2, kind: output, shape index: {}]
  %s3 = sld [smem:[#allocation0]]
  $region18: #{tpu_custom_call.1} parent=0
    _
  %s5 = ssub.s32 1, %s3
  %s6 = scalar_select 0, %s5, %s3
  // Predicated region
  $region2: #{tpu_custom_call.1} parent=0 // pred_check
    _
  $region3: #{tpu_custom_call.1} parent=0 // pred_check_branch
    %8 = sbr.rel (0) target = $region5
  $region4: #{tpu_custom_call.1} parent=0 // pred_region
    _
  $region5: #{tpu_custom_call.1} parent=0 // pred_fallthru
    _
  // Predicated region
  $region6: #{tpu_custom_call.1} parent=0 // pred_check
    _
  $region7: #{tpu_custom_call.1} parent=0 // pred_check_branch
    %10 = sbr.rel (0) target = $region9
  $region8: #{tpu_custom_call.1} parent=0 // pred_region
    _
  $region9: #{tpu_custom_call.1} parent=0 // pred_fallthru
    _
  %v11 = vld [vmem:[%s0] sm:$0x3f]
  %v12 = vld [vmem:[%s1] sm:$0xff]
  %vm13 = vcmask 64512
  %v15 = vsel %vm13, %v11, 0
  %17 = vmatprep.subr.mxu0 0.0
  %18 = vmatpush1.msra.mxu0 0.0
  %19 = vmatprep.subr.mxu0 0.0
  %20 = vmatpush1.msra.mxu0 0.0
  %21 = vmatprep.subr.mxu0 0.0
  %22 = vmatpush1.msra.mxu0 0.0
  %23 = vmatprep.subr.mxu0 0.0
  %24 = vmatpush1.msra.mxu0 0.0
  %25 = vmatprep.subr.mxu0 0.0
  %26 = vmatpush1.msra.mxu0 0.0
  %27 = vmatprep.subr.mxu0 0.0
  %28 = vmatpush1.msra.mxu0 0.0
  %29 = vmatprep.subr.mxu0 0.0
  %30 = vmatpush1.msra.mxu0 0.0
  %31 = vmatprep.subr.mxu0 0.0
  %32 = vmatpush1.msra.mxu0 0.0
  %33 = vmatprep.subr.mxu0 0.0
  %34 = vmatpush1.msra.mxu0 0.0
  %35 = vmatprep.subr.mxu0 0.0
  %36 = vmatpush1.msra.mxu0 0.0
  %37 = vmatprep.subr.mxu0 0.0
  %38 = vmatpush1.msra.mxu0 0.0
  %39 = vmatprep.subr.mxu0 0.0
  %40 = vmatpush1.msra.mxu0 0.0
  %41 = vmatprep.subr.mxu0 0.0
  %42 = vmatpush1.msra.mxu0 0.0
  %43 = vmatprep.subr.mxu0 0.0
  %44 = vmatpush1.msra.mxu0 0.0
  %45 = vmatprep.subr.mxu0 0.0
  %46 = vmatpush1.msra.mxu0 0.0
  %47 = vmatprep.subr.mxu0 0.0
  %48 = vmatpush1.msra.mxu0 %v12
  %49 = vmatprep.subr.mxu0 0.0
  %50 = vmatpush2.msra.mxu0 0.0
  %51 = vmatprep.subr.mxu0 0.0
  %52 = vmatpush2.msra.mxu0 0.0
  %53 = vmatprep.subr.mxu0 0.0
  %54 = vmatpush2.msra.mxu0 0.0
  %55 = vmatprep.subr.mxu0 0.0
  %56 = vmatpush2.msra.mxu0 0.0
  %57 = vmatprep.subr.mxu0 0.0
  %58 = vmatpush2.msra.mxu0 0.0
  %59 = vmatprep.subr.mxu0 0.0
  %60 = vmatpush2.msra.mxu0 0.0
  %61 = vmatprep.subr.mxu0 0.0
  %62 = vmatpush2.msra.mxu0 0.0
  %63 = vmatprep.subr.mxu0 0.0
  %64 = vmatpush2.msra.mxu0 0.0
  %65 = vmatprep.subr.mxu0 0.0
  %66 = vmatpush2.msra.mxu0 0.0
  %67 = vmatprep.subr.mxu0 0.0
  %68 = vmatpush2.msra.mxu0 0.0
  %69 = vmatprep.subr.mxu0 0.0
  %70 = vmatpush2.msra.mxu0 0.0
  %71 = vmatprep.subr.mxu0 0.0
  %72 = vmatpush2.msra.mxu0 0.0
  %73 = vmatprep.subr.mxu0 0.0
  %74 = vmatpush2.msra.mxu0 0.0
  %75 = vmatprep.subr.mxu0 0.0
  %76 = vmatpush2.msra.mxu0 0.0
  %77 = vmatprep.subr.mxu0 0.0
  %78 = vmatpush2.msra.mxu0 0.0
  %79 = vmatprep.subr.mxu0 0.0
  %80 = vmatpush2.msra.mxu0 0.0
  %81 = vmatprep.mubr.f32.mxu0 0.0
  %82 = vmatmul.mubr.f32.gmra.mxu0 %v15
  %v83 = vpop.f32.mrf.mxu0
  %v84 = vadd.f32 0.0, %v83
  %v85 = vpop.f32.mrf.mxu0
  %86 = vdwg.mxu0
  %v87 = vtanh.pop %v84
  %v88 = vmul.f32 %v87, 1.5925374
  %vm89 = vcmask 13312
  %90 = vst.msk [vmem:[%s2] sm:$0x3f] %vm89, %v88
  // Predicated region
  $region10: #{tpu_custom_call.1} parent=0 // pred_check
    _
  $region11: #{tpu_custom_call.1} parent=0 // pred_check_branch
    %92 = sbr.rel (0) target = $region13
  $region12: #{tpu_custom_call.1} parent=0 // pred_region
    _
  $region13: #{tpu_custom_call.1} parent=0 // pred_fallthru
    _
  // Predicated region
  $region14: #{tpu_custom_call.1} parent=0 // pred_check
    _
  $region15: #{tpu_custom_call.1} parent=0 // pred_check_branch
    %94 = sbr.rel (0) target = $region17
  $region16: #{tpu_custom_call.1} parent=0 // pred_region
    _
  $region17: #{tpu_custom_call.1} parent=0 // pred_fallthru
    _

</llo_original>
